<compile_context>
chip_gen: v7x
topology: tpu7x:2x2x1
jax: 0.10.0
libtpu: 0.0.40
codegen_flags: <defaults>
</compile_context>

<pallas_src>
import functools

import jax
import jax.numpy as jnp
from jax.experimental import pallas as pl
from jax.experimental.pallas import tpu as pltpu

_LANES = 128             # vreg lane width
_MAX_BLOCK_ROWS = 4096   # (4096, 128) f32 = 2 MiB per pipelined buffer
_MIN_GRID = 4            # >= 2 tiles per TensorCore on v7x when work allows
_PALLAS_MIN_ELEMS = 1 << 17   # below this, fused XLA beats a standalone call


def _hinge_kernel(out_ref, tgt_ref, loss_ref):
    # Cast on the loaded vregs (inputs stream in their native dtype).
    out = out_ref[...].astype(jnp.float32)          # (block_rows, 128)
    tgt = tgt_ref[...].astype(jnp.float32)
    # target_new[target < 1.0] = -1.0
    tgt_new = jnp.where(tgt < 1.0, jnp.float32(-1.0), tgt)
    # hinge = 1 - output * target_new ; clamp negatives to 0
    loss_ref[...] = jnp.maximum(1.0 - out * tgt_new, 0.0)


def _hinge_xla(out, tgt):
    """Fused-XLA fallback / ragged-tail path (identical math)."""
    out = out.astype(jnp.float32)
    tgt = tgt.astype(jnp.float32)
    tgt_new = jnp.where(tgt < 1.0, jnp.float32(-1.0), tgt)
    return jnp.maximum(1.0 - out * tgt_new, 0.0)


def _sublane_mult(dtype):
    """Minimum second-minor block multiple for a packed dtype (8/16/32)."""
    return 8 * max(1, 4 // jnp.dtype(dtype).itemsize)


def _tiling(n_elems, sub):
    """Pick (grid, block_rows, n_main) for a (rows, 128) lane-dense layout.

    block_rows is a multiple of `sub`, capped at _MAX_BLOCK_ROWS, and chosen
    so the grid has >= _MIN_GRID tiles whenever n_elems is large enough.
    n_main = grid * block_rows * 128 is the chunk-aligned prefix handled by
    Pallas; the remainder (< one chunk) is handled by the XLA tail path.
    """
    rows = n_elems // _LANES
    block_rows = min(_MAX_BLOCK_ROWS, (rows // _MIN_GRID) // sub * sub)
    block_rows = max(block_rows, sub)
    chunk = block_rows * _LANES
    grid = n_elems // chunk
    return grid, block_rows, grid * chunk


@functools.partial(jax.jit, static_argnames=("use_pallas",))
def my_hinge_loss(output, target, use_pallas=None):
    """output: (B, 1) or (B,); target: (B,). Returns (B,) float32 hinge loss."""
    # NOTE: like torch.squeeze on a (B,1) tensor; a (B, k>1) input would be
    # flattened here rather than broadcast-erroring as PyTorch would.
    out_flat = jnp.reshape(output, (-1,))     # native dtype, contiguous view
    tgt_flat = jnp.reshape(target, (-1,))
    B = out_flat.shape[0]

    if use_pallas is None:
        # Tiny / medium problems: fixed custom-call overhead dominates and the
        # fused XLA expression can fuse with the producer; skip Pallas.
        use_pallas = B >= _PALLAS_MIN_ELEMS

    sub = max(_sublane_mult(out_flat.dtype),
              _sublane_mult(tgt_flat.dtype),
              _sublane_mult(jnp.float32))
    if not use_pallas:
        return _hinge_xla(out_flat, tgt_flat)

    grid, block_rows, n_main = _tiling(B, sub)
    if n_main == 0:
        # Not even one (sub, 128) tile of work: pure XLA.
        return _hinge_xla(out_flat, tgt_flat)

    rows_main = n_main // _LANES
    # Chunk-aligned prefix: row-major reshape only (no pad, no dtype pass).
    out2d = out_flat[:n_main].reshape(rows_main, _LANES)
    tgt2d = tgt_flat[:n_main].reshape(rows_main, _LANES)

    loss2d = pl.pallas_call(
        _hinge_kernel,
        out_shape=jax.ShapeDtypeStruct((rows_main, _LANES), jnp.float32),
        grid=(grid,),
        in_specs=[
            pl.BlockSpec((block_rows, _LANES), lambda i: (i, 0)),
            pl.BlockSpec((block_rows, _LANES), lambda i: (i, 0)),
        ],
        out_specs=pl.BlockSpec((block_rows, _LANES), lambda i: (i, 0)),
        compiler_params=pltpu.CompilerParams(
            dimension_semantics=("parallel",),   # both TCs on v7x
            vmem_limit_bytes=32 << 20,           # 6 x <=2 MiB buffers fit everywhere
        ),
    )(out2d, tgt2d)

    loss_main = loss2d.reshape(-1)               # row-major reshape: free
    if n_main == B:                              # dense case: zero extra passes
        return loss_main

    # Ragged tail (< one chunk): fused XLA, then a single concat pass.
    loss_tail = _hinge_xla(out_flat[n_main:], tgt_flat[n_main:])
    return jnp.concatenate([loss_main, loss_tail])


def _reference(output, target):
    out_sq = jnp.reshape(output, (-1,)).astype(jnp.float32)
    tgt = jnp.reshape(target, (-1,)).astype(jnp.float32)
    tgt_new = jnp.where(tgt < 1.0, -1.0, tgt)
    return jnp.maximum(1.0 - out_sq * tgt_new, 0.0)


if __name__ == "__main__":
    key = jax.random.PRNGKey(0)
    k1, k2 = jax.random.split(key)

    # 1) Dense f32 case: B multiple of the chunk -> pure Pallas, 2 grid tiles.
    B = 2048
    output = jax.random.normal(k1, (B, 1), dtype=jnp.float32)
    target = jax.random.bernoulli(k2, 0.5, (B,)).astype(jnp.float32)
    loss = jax.block_until_ready(my_hinge_loss(output, target, use_pallas=True))
    assert loss.shape == (B,)
    assert jnp.allclose(loss, _reference(output, target), atol=1e-6), "dense f32 mismatch"

    # 2) Ragged case: Pallas on the aligned prefix + XLA tail + one concat.
    B2 = 2000
    out2 = jax.random.normal(k1, (B2, 1), dtype=jnp.float32)
    tgt2 = jax.random.bernoulli(k2, 0.5, (B2,)).astype(jnp.float32)
    loss2 = jax.block_until_ready(my_hinge_loss(out2, tgt2, use_pallas=True))
    assert loss2.shape == (B2,)
    assert jnp.allclose(loss2, _reference(out2, tgt2), atol=1e-6), "ragged mismatch"

    # 3) bf16 inputs: native-dtype streaming, cast happens inside the kernel
    #    (sublane alignment bumps to 16 rows automatically).
    B3 = 4096
    out3 = jax.random.normal(k1, (B3, 1), dtype=jnp.bfloat16)
    tgt3 = jax.random.bernoulli(k2, 0.5, (B3,)).astype(jnp.bfloat16)
    loss3 = jax.block_until_ready(my_hinge_loss(out3, tgt3, use_pallas=True))
    assert loss3.shape == (B3,)
    assert jnp.allclose(loss3, _reference(out3, tgt3), atol=1e-6), "bf16 mismatch"

    # 4) Default policy (small B -> fused XLA fallback) still correct.
    loss4 = jax.block_until_ready(my_hinge_loss(output, target))
    assert jnp.allclose(loss4, _reference(output, target), atol=1e-6), "fallback mismatch"

    print("KERNEL_OK")
</pallas_src>

<mosaic_0001>
module attributes {stable_mosaic.version = 11 : i64} {
  func.func @_hinge_kernel(%arg0: i32, %arg1: memref<8x128xf32, #tpu.memory_space<vmem>>, %arg2: memref<8x128xf32, #tpu.memory_space<vmem>>, %arg3: memref<8x128xf32, #tpu.memory_space<vmem>>) attributes {dimension_semantics = [#tpu.dimension_semantics<parallel>], iteration_bounds = array<i64: 2>, scalar_prefetch = 0 : i64, scratch_operands = 0 : i64, tpu.core_type = #tpu.core_type<tc>, window_params = [{transform_indices = @transform_0, window_bounds = array<i64: 8, 128>}, {transform_indices = @transform_1, window_bounds = array<i64: 8, 128>}, {transform_indices = @transform_2, window_bounds = array<i64: 8, 128>}]} {
    %c0 = arith.constant 0 : index
    %c0_0 = arith.constant 0 : index
    %0 = vector.load %arg1[%c0, %c0_0] : memref<8x128xf32, #tpu.memory_space<vmem>>, vector<8x128xf32>
    %c0_1 = arith.constant 0 : index
    %c0_2 = arith.constant 0 : index
    %1 = vector.load %arg2[%c0_1, %c0_2] : memref<8x128xf32, #tpu.memory_space<vmem>>, vector<8x128xf32>
    %cst = arith.constant 1.000000e+00 : f32
    %2 = vector.broadcast %cst : f32 to vector<8x128xf32>
    %3 = arith.cmpf olt, %1, %2 : vector<8x128xf32>
    %cst_3 = arith.constant -1.000000e+00 : f32
    %4 = vector.broadcast %cst_3 : f32 to vector<8x128xf32>
    %5 = arith.select %3, %4, %1 : vector<8x128xi1>, vector<8x128xf32>
    %6 = arith.mulf %0, %5 : vector<8x128xf32>
    %cst_4 = arith.constant 1.000000e+00 : f32
    %7 = vector.broadcast %cst_4 : f32 to vector<8x128xf32>
    %8 = arith.subf %7, %6 : vector<8x128xf32>
    %cst_5 = arith.constant 0.000000e+00 : f32
    %9 = vector.broadcast %cst_5 : f32 to vector<8x128xf32>
    %10 = arith.maximumf %8, %9 : vector<8x128xf32>
    %c0_6 = arith.constant 0 : index
    %c0_7 = arith.constant 0 : index
    %11 = vector.load %arg3[%c0_6, %c0_7] : memref<8x128xf32, #tpu.memory_space<vmem>>, vector<8x128xf32>
    tpu.vector_store %arg3[%c0_6, %c0_7], %10 {strides = array<i32>} : memref<8x128xf32, #tpu.memory_space<vmem>>, vector<8x128xf32>,
    return
  }
  func.func @transform_0(%arg0: i32) -> (i32, i32) {
    %c0_i32 = arith.constant 0 : i32
    %c0_i32_0 = arith.constant 0 : i32
    return %arg0, %c0_i32 : i32, i32
  }
  func.func @transform_1(%arg0: i32) -> (i32, i32) {
    %c0_i32 = arith.constant 0 : i32
    %c0_i32_0 = arith.constant 0 : i32
    return %arg0, %c0_i32 : i32, i32
  }
  func.func @transform_2(%arg0: i32) -> (i32, i32) {
    %c0_i32 = arith.constant 0 : i32
    %c0_i32_0 = arith.constant 0 : i32
    return %arg0, %c0_i32 : i32, i32
  }
}

</mosaic_0001>

<llo_original>
// kernel: my_hinge_loss.1
$region0: #{my_hinge_loss.1}
  #allocation0 [shape = 'u32[]', space=smem, size = 0x4, offset = 0x4, fixed_abs, tag = 'smem constant byte address 0x4 - core index']
  #allocation1 [shape = 'u32[144,128]{1,0:T(1,128)}', space=vmem, size = 0x12000, scoped, tag = 'internal scratch']
  %s0 = inlined_call_operand.hbm [shape: f32[16,128], index: 0, kind: input, shape index: {}]
  %s1 = inlined_call_operand.hbm [shape: f32[16,128], index: 1, kind: input, shape index: {}]
  %s2 = inlined_call_operand.hbm [shape: f32[16,128], index: 2, kind: output, shape index: {}]
  %s3 = sld [smem:[#allocation0]]
  $region49: #{my_hinge_loss.1} parent=0
    _
  %s5 = ssub.s32 1, %s3
  %s6 = scalar_select 0, %s5, %s3
  $region1: #{my_hinge_loss.1} parent=0
    #allocation2 [shape = 'u8[8192]{0}', space=vmem, size = 0x2000, scoped, tag = 'input window, operand 0']
    #allocation3 [shape = 's32[2]{0}', space=sflag, size = 0x8, scoped, tag = 'scoped memory for my_hinge_loss.1']
    #allocation4 [shape = 's32[2]{0}', space=sflag, size = 0x8, scoped, tag = 'scoped memory for my_hinge_loss.1']
    #allocation5 [shape = 'u8[8192]{0}', space=vmem, size = 0x2000, scoped, tag = 'input window, operand 1']
    #allocation6 [shape = 's32[2]{0}', space=sflag, size = 0x8, scoped, tag = 'scoped memory for my_hinge_loss.1']
    #allocation7 [shape = 'u8[8192]{0}', space=vmem, size = 0x2000, scoped, tag = 'output window, operand 0']
    %7 = vsyncpa [#allocation3], 0
    %s8 = scalar_lea.sflag [#allocation3], 1
    %9 = vsyncpa %s8, 0
    %10 = vsyncpa [#allocation6], 0
    %s11 = scalar_lea.sflag [#allocation6], 1
    %12 = vsyncpa %s11, 0
    %13 = vsyncpa [#allocation4], 0
    %s14 = scalar_lea.sflag [#allocation4], 1
    %15 = vsyncpa %s14, 0
    loop: start=0, step=1, limit=4
    $region2: #{my_hinge_loss.1} parent=1 // loop_pre_header
      _
    $region3: #{my_hinge_loss.1} parent=1 // loop_header
      %s17 = sphi 0, %s21
      %p18 = scmp.ge.s32.totalorder %s17, 4
      %s27 = sphi 0, %s29
      %s30 = sphi 0, %s27
      %s31 = sphi 0, %s30
      %s47 = sphi 0, %s31
      %s53 = sphi 0, %s55
      %s56 = sphi 0, %s53
      %s57 = sphi 0, %s56
      %s73 = sphi 0, %s57
      %s79 = sphi 0, %s81
      %s82 = sphi 0, %s79
      %s83 = sphi 0, %s82
      %s99 = sphi 0, %s83
    $region4: #{my_hinge_loss.1} parent=1 // loop_header_branch
      %20 = sbr.rel (%p18) target = $region8
    $region5: #{my_hinge_loss.1} parent=1 // loop_body
      %s22 = ssub.s32 %s17, 1
      %s23 = ssub.s32 %s17, 2
      %s24 = sadd.s32 %s17, 1
      %s25 = ssub.s32 %s17, %s24
      %p26 = scmp.eq.s32.totalorder %s25, 0
      %s28 = sadd.s32 %s27, 1
      %s29 = scalar_select %p26, %s27, %s28
      %p32 = pneg %p26
      %p33 = scmp.eq.s32.totalorder %s17, 1
      %p34 = por %p32, %p33
      %p35 = scmp.ne.s32.totalorder %s27, %s30
      %p36 = scmp.eq.s32.totalorder %s17, 0
      %p37 = por %p35, %p36
      %p38 = scmp.ne.s32.totalorder %s27, %s30
      %p39 = scmp.eq.s32.totalorder %s22, 1
      %p40 = por %p38, %p39
      %p41 = scmp.ne.s32.totalorder %s30, %s31
      %p42 = scmp.eq.s32.totalorder %s22, 0
      %p43 = por %p41, %p42
      %p44 = scmp.ne.s32.totalorder %s30, %s31
      %p45 = scmp.eq.s32.totalorder %s23, 1
      %p46 = por %p44, %p45
      %p48 = scmp.ne.s32.totalorder %s31, %s47
      %p49 = scmp.eq.s32.totalorder %s23, 0
      %p50 = por %p48, %p49
      %s51 = ssub.s32 %s17, %s24
      %p52 = scmp.eq.s32.totalorder %s51, 0
      %s54 = sadd.s32 %s53, 1
      %s55 = scalar_select %p52, %s53, %s54
      %p58 = pneg %p52
      %p59 = scmp.eq.s32.totalorder %s17, 1
      %p60 = por %p58, %p59
      %p61 = scmp.ne.s32.totalorder %s53, %s56
      %p62 = scmp.eq.s32.totalorder %s17, 0
      %p63 = por %p61, %p62
      %p64 = scmp.ne.s32.totalorder %s53, %s56
      %p65 = scmp.eq.s32.totalorder %s22, 1
      %p66 = por %p64, %p65
      %p67 = scmp.ne.s32.totalorder %s56, %s57
      %p68 = scmp.eq.s32.totalorder %s22, 0
      %p69 = por %p67, %p68
      %p70 = scmp.ne.s32.totalorder %s56, %s57
      %p71 = scmp.eq.s32.totalorder %s23, 1
      %p72 = por %p70, %p71
      %p74 = scmp.ne.s32.totalorder %s57, %s73
      %p75 = scmp.eq.s32.totalorder %s23, 0
      %p76 = por %p74, %p75
      %s77 = ssub.s32 %s17, %s24
      %p78 = scmp.eq.s32.totalorder %s77, 0
      %s80 = sadd.s32 %s79, 1
      %s81 = scalar_select %p78, %s79, %s80
      %p84 = pneg %p78
      %p85 = scmp.eq.s32.totalorder %s17, 1
      %p86 = por %p84, %p85
      %p87 = scmp.ne.s32.totalorder %s79, %s82
      %p88 = scmp.eq.s32.totalorder %s17, 0
      %p89 = por %p87, %p88
      %p90 = scmp.ne.s32.totalorder %s79, %s82
      %p91 = scmp.eq.s32.totalorder %s22, 1
      %p92 = por %p90, %p91
      %p93 = scmp.ne.s32.totalorder %s82, %s83
      %p94 = scmp.eq.s32.totalorder %s22, 0
      %p95 = por %p93, %p94
      %p96 = scmp.ne.s32.totalorder %s82, %s83
      %p97 = scmp.eq.s32.totalorder %s23, 1
      %p98 = por %p96, %p97
      %p100 = scmp.ne.s32.totalorder %s83, %s99
      %p101 = scmp.eq.s32.totalorder %s23, 0
      %p102 = por %p100, %p101
      %p103 = scmp.le.s32.totalorder 1, %s17
      %p104 = scmp.lt.s32.totalorder %s17, 3
      %p105 = pnand %p103, %p104
      %p106 = pneg %p105
      // Predicated region
      $region9: #{my_hinge_loss.1} parent=5 // pred_check
        _
      $region10: #{my_hinge_loss.1} parent=5 // pred_check_branch
        %108 = sbr.rel (%p105) target = $region12
      $region11: #{my_hinge_loss.1} parent=5 // pred_region
        %s109 = ssub.s32 %s17, 1
      $region12: #{my_hinge_loss.1} parent=5 // pred_fallthru
        _
      %p110 = scmp.lt.s32.totalorder %s17, 2
      // Predicated region
      $region13: #{my_hinge_loss.1} parent=5 // pred_check
        %p111 = pneg %p110
      $region14: #{my_hinge_loss.1} parent=5 // pred_check_branch
        %113 = sbr.rel (%p111) target = $region16
      $region15: #{my_hinge_loss.1} parent=5 // pred_region
        // Predicated region
        $region17: #{my_hinge_loss.1} parent=15 // pred_check
          %p114 = pneg %p37
        $region18: #{my_hinge_loss.1} parent=15 // pred_check_branch
          %116 = sbr.rel (%p114) target = $region20
        $region19: #{my_hinge_loss.1} parent=15 // pred_region
          %s117 = sand.u32 %s27, 1
          %s118 = scalar_lea.sflag [#allocation3], %s117
          %s119 = sand.u32 %s27, 1
          %s120 = smul.addr %s119, 8
          %s121 = scalar_lea.vmem [#allocation2], %s120
          %s123 = ssub.s32 128, 128
          %124 = vsyncadd %s118, %s123
          %s125 = smul.addr %s17, 128
          %s126 = scalar_lea.hbm %s0, %s125
          %s128 = sshll.u32 %s121, 4
          %s129 = int_to_ptr.vmem [resolvable:$true] %s128
          %131 = dma.hbm_to_vmem [thread:$0]  %s126, 128, %s129, %s118
        $region20: #{my_hinge_loss.1} parent=15 // pred_fallthru
          _
        // Predicated region
        $region21: #{my_hinge_loss.1} parent=15 // pred_check
          %p132 = pneg %p63
        $region22: #{my_hinge_loss.1} parent=15 // pred_check_branch
          %134 = sbr.rel (%p132) target = $region24
        $region23: #{my_hinge_loss.1} parent=15 // pred_region
          %s135 = sand.u32 %s53, 1
          %s136 = scalar_lea.sflag [#allocation6], %s135
          %s137 = sand.u32 %s53, 1
          %s138 = smul.addr %s137, 8
          %s139 = scalar_lea.vmem [#allocation5], %s138
          %s141 = ssub.s32 128, 128
          %142 = vsyncadd %s136, %s141
          %s143 = smul.addr %s17, 128
          %s144 = scalar_lea.hbm %s1, %s143
          %s146 = sshll.u32 %s139, 4
          %s147 = int_to_ptr.vmem [resolvable:$true] %s146
          %149 = dma.hbm_to_vmem [thread:$0]  %s144, 128, %s147, %s136
        $region24: #{my_hinge_loss.1} parent=15 // pred_fallthru
          _
      $region16: #{my_hinge_loss.1} parent=5 // pred_fallthru
        _
      %p150 = scmp.le.s32.totalorder 1, %s17
      %p151 = scmp.lt.s32.totalorder %s17, 3
      %p152 = pnand %p150, %p151
      %p153 = pneg %p152
      // Predicated region
      $region25: #{my_hinge_loss.1} parent=5 // pred_check
        _
      $region26: #{my_hinge_loss.1} parent=5 // pred_check_branch
        %155 = sbr.rel (%p152) target = $region28
      $region27: #{my_hinge_loss.1} parent=5 // pred_region
        %s156 = ssub.s32 %s17, 1
        %s157 = sand.u32 %s30, 1
        %s158 = scalar_lea.sflag [#allocation3], %s157
        %s159 = sand.u32 %s30, 1
        %s160 = smul.addr %s159, 8
        %s161 = scalar_lea.vmem [#allocation2], %s160
        // Predicated region
        $region29: #{my_hinge_loss.1} parent=27 // pred_check
          %p162 = pneg %p43
        $region30: #{my_hinge_loss.1} parent=27 // pred_check_branch
          %164 = sbr.rel (%p162) target = $region32
        $region31: #{my_hinge_loss.1} parent=27 // pred_region
          %165 = dma.done %s158, 128
        $region32: #{my_hinge_loss.1} parent=27 // pred_fallthru
          _
        %s166 = sand.u32 %s56, 1
        %s167 = scalar_lea.sflag [#allocation6], %s166
        %s168 = sand.u32 %s56, 1
        %s169 = smul.addr %s168, 8
        %s170 = scalar_lea.vmem [#allocation5], %s169
        // Predicated region
        $region33: #{my_hinge_loss.1} parent=27 // pred_check
          %p171 = pneg %p69
        $region34: #{my_hinge_loss.1} parent=27 // pred_check_branch
          %173 = sbr.rel (%p171) target = $region36
        $region35: #{my_hinge_loss.1} parent=27 // pred_region
          %174 = dma.done %s167, 128
        $region36: #{my_hinge_loss.1} parent=27 // pred_fallthru
          _
        %s175 = sand.u32 %s30, 1
        %s176 = scalar_lea.sflag [#allocation3], %s175
        %s177 = sand.u32 %s30, 1
        %s178 = smul.addr %s177, 8
        %s179 = scalar_lea.vmem [#allocation2], %s178
        %p180 = pneg %p43
        %p181 = pneg %p40
        %s182 = sand.u32 %s56, 1
        %s183 = scalar_lea.sflag [#allocation6], %s182
        %s184 = sand.u32 %s56, 1
        %s185 = smul.addr %s184, 8
        %s186 = scalar_lea.vmem [#allocation5], %s185
        %p187 = pneg %p69
        %p188 = pneg %p66
        %p189 = pneg %p95
        %p190 = pneg %p92
        %s191 = sand.u32 %s82, 1
        %s192 = scalar_lea.sflag [#allocation4], %s191
        %s193 = sand.u32 %s82, 1
        %s194 = smul.addr %s193, 8
        %s195 = scalar_lea.vmem [#allocation7], %s194
        %v196 = vld [vmem:[%s161] sm:$0xff]
        %v197 = vld [vmem:[%s170] sm:$0xff]
        %vm198 = vcmp.lt.f32.partialorder %v197, 1.0
        %v199 = vsel %vm198, -1.0, %v197
        %v200 = vmul.f32 %v196, %v199
        %v201 = vsub.f32 1.0, %v200
        %v202 = vmax.f32 %v201, 0.0
        %203 = vst [vmem:[%s195] sm:$0xff] %v202
        %s204 = sand.u32 %s82, 1
        %s205 = scalar_lea.sflag [#allocation4], %s204
        %s206 = sand.u32 %s82, 1
        %s207 = smul.addr %s206, 8
        %s208 = scalar_lea.vmem [#allocation7], %s207
        // Predicated region
        $region37: #{my_hinge_loss.1} parent=27 // pred_check
          %p209 = pneg %p92
        $region38: #{my_hinge_loss.1} parent=27 // pred_check_branch
          %211 = sbr.rel (%p209) target = $region40
        $region39: #{my_hinge_loss.1} parent=27 // pred_region
          %s213 = ssub.s32 128, 128
          %214 = vsyncadd %s205, %s213
          %s215 = smul.addr %s22, 128
          %s216 = scalar_lea.hbm %s2, %s215
          %s218 = sshll.u32 %s208, 4
          %s219 = int_to_ptr.vmem [resolvable:$true] %s218
          %221 = dma.vmem_to_hbm [thread:$0]  %s219, 128, %s216, %s205
        $region40: #{my_hinge_loss.1} parent=27 // pred_fallthru
          _
      $region28: #{my_hinge_loss.1} parent=5 // pred_fallthru
        _
      %p222 = scmp.le.s32.totalorder 2, %s17
      // Predicated region
      $region41: #{my_hinge_loss.1} parent=5 // pred_check
        %p223 = pneg %p222
      $region42: #{my_hinge_loss.1} parent=5 // pred_check_branch
        %225 = sbr.rel (%p223) target = $region44
      $region43: #{my_hinge_loss.1} parent=5 // pred_region
        %s226 = ssub.s32 %s17, 2
        // Predicated region
        $region45: #{my_hinge_loss.1} parent=43 // pred_check
          %p227 = pneg %p98
        $region46: #{my_hinge_loss.1} parent=43 // pred_check_branch
          %229 = sbr.rel (%p227) target = $region48
        $region47: #{my_hinge_loss.1} parent=43 // pred_region
          %s230 = sand.u32 %s83, 1
          %s231 = scalar_lea.sflag [#allocation4], %s230
          %s232 = sand.u32 %s83, 1
          %s233 = smul.addr %s232, 8
          %s234 = scalar_lea.vmem [#allocation7], %s233
          %235 = dma.done %s231, 128
        $region48: #{my_hinge_loss.1} parent=43 // pred_fallthru
          _
      $region44: #{my_hinge_loss.1} parent=5 // pred_fallthru
        _
    $region6: #{my_hinge_loss.1} parent=1 // loop_footer
      %s21 = sadd.s32 1, %s17
    $region7: #{my_hinge_loss.1} parent=1 // loop_footer_branch
      %16 = sbr.rel target = $region3
    $region8: #{my_hinge_loss.1} parent=1 // loop_exit
      _
    %236 = vsyncpa [#allocation3], 1
    %s237 = scalar_lea.sflag [#allocation3], 1
    %238 = vsyncpa %s237, 1
    %239 = vsyncpa [#allocation6], 1
    %s240 = scalar_lea.sflag [#allocation6], 1
    %241 = vsyncpa %s240, 1
    %242 = vsyncpa [#allocation4], 1
    %s243 = scalar_lea.sflag [#allocation4], 1
    %244 = vsyncpa %s243, 1

</llo_original>
